<compile_context>
chip_gen: v7x
topology: tpu7x:2x2x1
jax: 0.10.0
libtpu: 0.0.40
codegen_flags: <defaults>
</compile_context>

<pallas_src>
import jax
import jax.numpy as jnp
from jax import lax
from jax.experimental import pallas as pl
from jax.experimental.pallas import tpu as pltpu

H = 128        # GRU hidden size
TCN_OUT = 4    # tcn_output_dim
DEC_IN = 16    # decoder_input_dim
TDH = 32       # temporal_decoder_hidden
KSIZE = 4      # TCN conv kernel size


# ----------------------------------------------------------------------------------------------
# packing helpers (wrapper side, layout only)
# ----------------------------------------------------------------------------------------------
def _pack_rows(mats):
    """Row-stack 2-D matrices (cols zero-padded to a common width). Returns (packed, row_offsets)."""
    width = max(int(m.shape[1]) for m in mats)
    offs, blocks, cur = [], [], 0
    for m in mats:
        blocks.append(jnp.pad(m, ((0, 0), (0, width - int(m.shape[1])))))
        offs.append(cur)
        cur += int(m.shape[0])
    return jnp.concatenate(blocks, axis=0), offs


def _pack_lanes(vecs, align=128):
    """Pack 1-D vectors into one (1, N) row; every segment starts at a 128-aligned lane offset."""
    offs, chunks, cur = [], [], 0
    for v in vecs:
        v = v.reshape(-1)
        n = int(v.shape[0])
        npad = -(-n // align) * align
        chunks.append(jnp.pad(v, (0, npad - n)))
        offs.append(cur)
        cur += npad
    return jnp.concatenate(chunks).reshape(1, cur), offs


# ----------------------------------------------------------------------------------------------
# kernel
# ----------------------------------------------------------------------------------------------
def _build_kernel(B, S, C, P, sw_offs, b_offs):
    Lout = S - 1
    OC = S
    SC = S * C
    DP = DEC_IN * P
    CF = OC * Lout              # conv-flatten width (PyTorch Flatten order oc*Lout + l)
    T1W = P * TDH               # block-diag temporal-decoder hidden width
    OUTW = P * C
    OUT_IN = T1W + DP + SC      # rows of the fused output weight

    rA, rFC, rW1, rWO = sw_offs
    oCV, oFC, oIH, oHH, oD1, oDC, oT1, oOU = b_offs

    def kernel(xflat_ref, wih_ref, whh_ref, wd1_ref, wdcat_ref,
               smallw_ref, bias_ref, y_ref, enc_sc):
        f32 = jnp.float32
        xflat = xflat_ref[...]                                            # (B, S*C)

        # ---- TCN: Conv1d(C->S, k=4, pad=1) + ReLU + Flatten + Linear, as two GEMMs ------------
        a_t = smallw_ref[rA:rA + SC, 0:CF]                                # (S*C, CF)
        convf = jnp.dot(xflat, a_t, preferred_element_type=f32) + bias_ref[:, oCV:oCV + CF]
        convf = jnp.maximum(convf, 0.0)                                   # (B, CF)
        wfc = smallw_ref[rFC:rFC + CF, 0:TCN_OUT]                         # (CF, 4)
        cnn = jnp.dot(convf, wfc, preferred_element_type=f32) + bias_ref[:, oFC:oFC + TCN_OUT]

        # ---- GRU over the batch axis (PyTorch unbatched-sequence semantics for 2-D input) -----
        gin = jnp.concatenate([xflat, cnn], axis=1)                       # (B, S*C + 4)
        gi = jnp.dot(gin, wih_ref[...], preferred_element_type=f32) + bias_ref[:, oIH:oIH + 3 * H]
        b_hh = bias_ref[:, oHH:oHH + 3 * H]                               # (1, 3H)
        whh = whh_ref[...]                                                # (H, 3H)

        def cell(gi_b, gh, h_prev):
            r = jax.nn.sigmoid(gi_b[:, :H] + gh[:, :H])
            z = jax.nn.sigmoid(gi_b[:, H:2 * H] + gh[:, H:2 * H])
            n = jnp.tanh(gi_b[:, 2 * H:] + r * gh[:, 2 * H:])
            return (1.0 - z) * n + z * h_prev

        # step 0 hoisted: h0 == 0  =>  gh = b_hh, W_hh matmul skipped
        h = cell(gi[0:1, :], b_hh, jnp.zeros((1, H), f32))
        enc_sc[0:1, :] = h
        for b in range(1, B):                      # static unroll; recurrence is inherently serial
            gh = jnp.dot(h, whh, preferred_element_type=f32) + b_hh
            h = cell(gi[b:b + 1, :], gh, h)
            enc_sc[b:b + 1, :] = h
        enc = enc_sc[...]                                                 # (B, H)

        # ---- decoder ResidualBlock(H -> DEC_IN*P): dense + skip fused via stacked weights -----
        h1 = jnp.maximum(jnp.dot(enc, wd1_ref[...], preferred_element_type=f32)
                         + bias_ref[:, oD1:oD1 + H], 0.0)                 # (B, H)
        dcat = jnp.concatenate([h1, enc], axis=1)                         # (B, 2H)
        dec = jnp.dot(dcat, wdcat_ref[...], preferred_element_type=f32) + bias_ref[:, oDC:oDC + DP]

        # ---- temporal decoder (ResidualBlock 16->C) over all P steps via block-diag weights,
        #      with lookback skip + seq_last folded into the same final GEMM ---------------------
        w1bd = smallw_ref[rW1:rW1 + DP, 0:T1W]                            # (DP, P*TDH)
        t1 = jnp.maximum(jnp.dot(dec, w1bd, preferred_element_type=f32)
                         + bias_ref[:, oT1:oT1 + T1W], 0.0)               # (B, P*TDH)
        wout = smallw_ref[rWO:rWO + OUT_IN, 0:OUTW]                       # (P*TDH+DP+S*C, P*C)
        oin = jnp.concatenate([t1, dec, xflat], axis=1)                   # (B, OUT_IN)
        y_ref[...] = jnp.dot(oin, wout, preferred_element_type=f32) + bias_ref[:, oOU:oOU + OUTW]

    return kernel


# ----------------------------------------------------------------------------------------------
# parameters
# ----------------------------------------------------------------------------------------------
def init_params(key, seq_len, enc_in, pred_len):
    S, C, P = seq_len, enc_in, pred_len
    OC, Lout = S, S - 1
    DP = DEC_IN * P
    in_gru = S * C + TCN_OUT
    shapes = dict(
        conv_w=(OC, C, KSIZE), conv_b=(OC,),
        fc_w=(TCN_OUT, OC * Lout), fc_b=(TCN_OUT,),
        w_ih=(3 * H, in_gru), w_hh=(3 * H, H), b_ih=(3 * H,), b_hh=(3 * H,),
        d1_w=(H, H), d1_b=(H,), d2_w=(DP, H), d2_b=(DP,), ds_w=(DP, H), ds_b=(DP,),
        t1_w=(TDH, DEC_IN), t1_b=(TDH,), t2_w=(C, TDH), t2_b=(C,),
        ts_w=(C, DEC_IN), ts_b=(C,),
        ls_w=(P, S), ls_b=(P,),
    )
    params = {}
    names = sorted(shapes)
    keys = jax.random.split(key, len(names))
    for k_, name in zip(keys, names):
        params[name] = (0.1 * jax.random.normal(k_, shapes[name])).astype(jnp.float32)
    return params


# ----------------------------------------------------------------------------------------------
# forward wrapper
# ----------------------------------------------------------------------------------------------
def model_forward(params, x, x_mark=None, y_true=None, y_mark=None):
    # x: (B, S, C) float32 lookback window; x_mark / y_true / y_mark are unused by the forward.
    p = params
    B, S, C = x.shape
    P = int(p["ls_w"].shape[0])
    K = KSIZE
    OC, Lout = S, S - 1
    SC, CF, DP = S * C, OC * (S - 1), DEC_IN * P

    x = x.astype(jnp.float32)
    xflat = x.reshape(B, SC)

    # ---- weight preprocessing (layout / algebra on parameters only; all tiny) -----------------
    # Conv1d(k=4, pad=1) as a dense (S*C -> OC*Lout) matrix, columns in PyTorch Flatten order.
    l_idx = jnp.arange(Lout)
    s_idx = jnp.arange(S)
    k_idx = s_idx[None, :] - l_idx[:, None] + 1                       # (Lout, S); pad=1 offset
    valid = (k_idx >= 0) & (k_idx < K)
    k_safe = jnp.clip(k_idx, 0, K - 1)
    ag = p["conv_w"][:, :, k_safe]                                    # (OC, C, Lout, S)
    ag = jnp.where(valid[None, None], ag, 0.0)
    a_t = jnp.transpose(ag, (3, 1, 0, 2)).reshape(SC, CF)             # [s*C+c, oc*Lout+l]

    wfc_t = p["fc_w"].T                                               # (CF, 4)
    wih_t = p["w_ih"].T                                               # (S*C+4, 3H)
    whh_t = p["w_hh"].T                                               # (H, 3H)
    wd1_t = p["d1_w"].T                                               # (H, H)
    wdcat = jnp.concatenate([p["d2_w"].T, p["ds_w"].T], axis=0)       # (2H, DP): dense ; skip

    eye_p = jnp.eye(P, dtype=jnp.float32)
    w1_bd = jnp.kron(eye_p, p["t1_w"].T)                              # (DP, P*TDH) block-diag
    ls_eff = p["ls_w"].at[:, S - 1].add(1.0)                          # fold seq_last into skip
    w_out = jnp.concatenate([
        jnp.kron(eye_p, p["t2_w"].T),                                 # (P*TDH, P*C)
        jnp.kron(eye_p, p["ts_w"].T),                                 # (DP,    P*C)
        jnp.kron(ls_eff.T, jnp.eye(C, dtype=jnp.float32)),            # (S*C,   P*C)
    ], axis=0)

    smallw, sw_offs = _pack_rows([a_t, wfc_t, w1_bd, w_out])
    biasv, b_offs = _pack_lanes([
        jnp.repeat(p["conv_b"], Lout),                                # conv bias, flatten order
        p["fc_b"],
        p["b_ih"],
        p["b_hh"],
        p["d1_b"],
        p["d2_b"] + p["ds_b"],                                        # residual biases pre-added
        jnp.tile(p["t1_b"], P),
        jnp.repeat(p["ls_b"], C) + jnp.tile(p["t2_b"] + p["ts_b"], P),
    ])

    kernel = _build_kernel(B, S, C, P, sw_offs, b_offs)
    args = (xflat, wih_t, whh_t, wd1_t, wdcat, smallw, biasv)

    flops = 2 * (B * SC * CF + B * CF * TCN_OUT + B * (SC + TCN_OUT) * 3 * H
                 + (B - 1) * H * 3 * H + B * H * H + B * 2 * H * DP
                 + B * DP * P * TDH + B * (P * TDH + DP + SC) * P * C)
    bytes_accessed = sum(int(a.size) * 4 for a in args) + B * P * C * 4

    vmem = pltpu.MemorySpace.VMEM
    y2d = pl.pallas_call(
        kernel,
        out_shape=jax.ShapeDtypeStruct((B, P * C), jnp.float32),
        in_specs=[pl.BlockSpec(memory_space=vmem) for _ in args],
        out_specs=pl.BlockSpec(memory_space=vmem),
        scratch_shapes=[pltpu.VMEM((B, H), jnp.float32)],
        compiler_params=pltpu.CompilerParams(vmem_limit_bytes=8 * 1024 * 1024),
        cost_estimate=pl.CostEstimate(flops=flops, transcendentals=3 * B * H,
                                      bytes_accessed=bytes_accessed),
    )(*args)
    return y2d.reshape(B, P, C)


# ----------------------------------------------------------------------------------------------
# plain-JAX reference mirroring the PyTorch forward (eval mode)
# ----------------------------------------------------------------------------------------------
def reference_forward(params, x):
    p = params
    B, S, C = x.shape
    P = p["ls_w"].shape[0]
    x = x.astype(jnp.float32)
    xt = jnp.transpose(x, (0, 2, 1))                                        # (B, C, S)
    conv = lax.conv_general_dilated(xt, p["conv_w"], window_strides=(1,),
                                    padding=[(1, 1)],
                                    dimension_numbers=("NCH", "OIH", "NCH"))
    conv = jax.nn.relu(conv + p["conv_b"][None, :, None])                   # (B, OC, S-1)
    cnn = conv.reshape(B, -1) @ p["fc_w"].T + p["fc_b"]                     # (B, 4)
    inp = jnp.concatenate([x.reshape(B, -1), cnn], axis=1)                  # (B, S*C+4)

    def cell(h, xb):
        gi = p["w_ih"] @ xb + p["b_ih"]
        gh = p["w_hh"] @ h + p["b_hh"]
        r = jax.nn.sigmoid(gi[:H] + gh[:H])
        z = jax.nn.sigmoid(gi[H:2 * H] + gh[H:2 * H])
        n = jnp.tanh(gi[2 * H:] + r * gh[2 * H:])
        h_new = (1 - z) * n + z * h
        return h_new, h_new

    _, enc = lax.scan(cell, jnp.zeros((H,), jnp.float32), inp)              # (B, H)
    h1 = jax.nn.relu(enc @ p["d1_w"].T + p["d1_b"])
    dec = h1 @ p["d2_w"].T + p["d2_b"] + enc @ p["ds_w"].T + p["ds_b"]
    dec = dec.reshape(B, P, DEC_IN)
    t1 = jax.nn.relu(dec @ p["t1_w"].T + p["t1_b"])
    td = t1 @ p["t2_w"].T + p["t2_b"] + dec @ p["ts_w"].T + p["ts_b"]       # (B, P, C)
    skip = jnp.einsum("bsc,ps->bpc", x, p["ls_w"]) + p["ls_b"][None, :, None]
    return td + skip + x[:, -1:, :]


if __name__ == "__main__":
    B, S, C, P = 2, 8, 4, 4     # batch, seq_len, enc_in, pred_len (d_model unused in forward)
    key = jax.random.PRNGKey(0)
    kp, kx, km, ky, kym = jax.random.split(key, 5)
    params = init_params(kp, S, C, P)
    x = jax.random.normal(kx, (B, S, C), jnp.float32)
    x_mark = jax.random.normal(km, (B, S, 4), jnp.float32)    # unused by forward
    y_true = jax.random.normal(ky, (B, P, C), jnp.float32)    # unused by forward
    y_mark = jax.random.normal(kym, (B, P, 4), jnp.float32)   # unused by forward

    y = jax.jit(model_forward)(params, x, x_mark, y_true, y_mark)
    y = jax.block_until_ready(y)

    y_ref = reference_forward(params, x)
    err = float(jnp.max(jnp.abs(y - y_ref)))
    assert y.shape == (B, P, C), y.shape
    assert err < 1e-3, f"kernel vs reference mismatch: {err}"
    print("KERNEL_OK")
</pallas_src>

<mosaic_0001>
module attributes {stable_mosaic.version = 11 : i64} {
  func.func @kernel(%arg0: memref<2x32xf32, #tpu.memory_space<vmem>>, %arg1: memref<36x384xf32, #tpu.memory_space<vmem>>, %arg2: memref<128x384xf32, #tpu.memory_space<vmem>>, %arg3: memref<128x128xf32, #tpu.memory_space<vmem>>, %arg4: memref<256x64xf32, #tpu.memory_space<vmem>>, %arg5: memref<376x128xf32, #tpu.memory_space<vmem>>, %arg6: memref<1x1536xf32, #tpu.memory_space<vmem>>, %arg7: memref<2x16xf32, #tpu.memory_space<vmem>>, %arg8: memref<2x128xf32, #tpu.memory_space<vmem>>) attributes {dimension_semantics = [], scalar_prefetch = 0 : i64, scratch_operands = 1 : i64, tpu.core_type = #tpu.core_type<tc>} {
    %c0 = arith.constant 0 : index
    %c0_0 = arith.constant 0 : index
    %0 = vector.load %arg0[%c0, %c0_0] : memref<2x32xf32, #tpu.memory_space<vmem>>, vector<2x32xf32>
    %c0_1 = arith.constant 0 : index
    %c0_2 = arith.constant 0 : index
    %1 = vector.load %arg5[%c0_1, %c0_2] : memref<376x128xf32, #tpu.memory_space<vmem>>, vector<32x56xf32>
    %cst = arith.constant dense<0.000000e+00> : vector<2x56xf32>
    %2 = tpu.matmul %0, %1, %cst {dimension_numbers = #tpu.dot_dimension_numbers<[1], [0], [0], [1], [0, 0, 1, 1], [], []>} : vector<2x32xf32>, vector<32x56xf32>, vector<2x56xf32> -> vector<2x56xf32>
    %c0_3 = arith.constant 0 : index
    %c0_4 = arith.constant 0 : index
    %3 = vector.load %arg6[%c0_3, %c0_4] : memref<1x1536xf32, #tpu.memory_space<vmem>>, vector<1x56xf32>
    %4 = vector.broadcast %3 : vector<1x56xf32> to vector<2x56xf32>
    %5 = arith.addf %2, %4 : vector<2x56xf32>
    %cst_5 = arith.constant 0.000000e+00 : f32
    %6 = vector.broadcast %cst_5 : f32 to vector<2x56xf32>
    %7 = arith.maximumf %5, %6 : vector<2x56xf32>
    %c32 = arith.constant 32 : index
    %c0_6 = arith.constant 0 : index
    %8 = vector.load %arg5[%c32, %c0_6] : memref<376x128xf32, #tpu.memory_space<vmem>>, vector<56x4xf32>
    %cst_7 = arith.constant dense<0.000000e+00> : vector<2x4xf32>
    %9 = tpu.matmul %7, %8, %cst_7 {dimension_numbers = #tpu.dot_dimension_numbers<[1], [0], [0], [1], [0, 0, 1, 1], [], []>} : vector<2x56xf32>, vector<56x4xf32>, vector<2x4xf32> -> vector<2x4xf32>
    %c0_8 = arith.constant 0 : index
    %c128 = arith.constant 128 : index
    %10 = vector.load %arg6[%c0_8, %c128] : memref<1x1536xf32, #tpu.memory_space<vmem>>, vector<1x4xf32>
    %11 = vector.broadcast %10 : vector<1x4xf32> to vector<2x4xf32>
    %12 = arith.addf %9, %11 : vector<2x4xf32>
    %13 = tpu.concatenate %0, %12 in 1 : vector<2x32xf32>, vector<2x4xf32> -> vector<2x36xf32>
    %c0_9 = arith.constant 0 : index
    %c0_10 = arith.constant 0 : index
    %14 = vector.load %arg1[%c0_9, %c0_10] : memref<36x384xf32, #tpu.memory_space<vmem>>, vector<36x384xf32>
    %cst_11 = arith.constant dense<0.000000e+00> : vector<2x384xf32>
    %15 = tpu.matmul %13, %14, %cst_11 {dimension_numbers = #tpu.dot_dimension_numbers<[1], [0], [0], [1], [0, 0, 1, 1], [], []>} : vector<2x36xf32>, vector<36x384xf32>, vector<2x384xf32> -> vector<2x384xf32>
    %c0_12 = arith.constant 0 : index
    %c256 = arith.constant 256 : index
    %16 = vector.load %arg6[%c0_12, %c256] : memref<1x1536xf32, #tpu.memory_space<vmem>>, vector<1x384xf32>
    %17 = vector.broadcast %16 : vector<1x384xf32> to vector<2x384xf32>
    %18 = arith.addf %15, %17 : vector<2x384xf32>
    %c0_13 = arith.constant 0 : index
    %c640 = arith.constant 640 : index
    %19 = vector.load %arg6[%c0_13, %c640] : memref<1x1536xf32, #tpu.memory_space<vmem>>, vector<1x384xf32>
    %c0_14 = arith.constant 0 : index
    %c0_15 = arith.constant 0 : index
    %20 = vector.load %arg2[%c0_14, %c0_15] : memref<128x384xf32, #tpu.memory_space<vmem>>, vector<128x384xf32>
    %21 = vector.extract_strided_slice %18 {offsets = [0, 0], sizes = [1, 384], strides = [1, 1]} : vector<2x384xf32> to vector<1x384xf32>
    %cst_16 = arith.constant 0.000000e+00 : f32
    %22 = vector.broadcast %cst_16 : f32 to vector<1x128xf32>
    %23 = vector.extract_strided_slice %21 {offsets = [0, 0], sizes = [1, 128], strides = [1, 1]} : vector<1x384xf32> to vector<1x128xf32>
    %24 = vector.extract_strided_slice %19 {offsets = [0, 0], sizes = [1, 128], strides = [1, 1]} : vector<1x384xf32> to vector<1x128xf32>
    %25 = arith.addf %23, %24 : vector<1x128xf32>
    %26 = arith.negf %25 : vector<1x128xf32>
    %27 = math.exp %26 : vector<1x128xf32>
    %cst_17 = arith.constant 1.000000e+00 : f32
    %28 = vector.broadcast %cst_17 : f32 to vector<1x128xf32>
    %29 = arith.addf %28, %27 : vector<1x128xf32>
    %30 = arith.divf %28, %29 : vector<1x128xf32>
    %31 = vector.extract_strided_slice %21 {offsets = [0, 128], sizes = [1, 128], strides = [1, 1]} : vector<1x384xf32> to vector<1x128xf32>
    %32 = vector.extract_strided_slice %19 {offsets = [0, 128], sizes = [1, 128], strides = [1, 1]} : vector<1x384xf32> to vector<1x128xf32>
    %33 = arith.addf %31, %32 : vector<1x128xf32>
    %34 = arith.negf %33 : vector<1x128xf32>
    %35 = math.exp %34 : vector<1x128xf32>
    %cst_18 = arith.constant 1.000000e+00 : f32
    %36 = vector.broadcast %cst_18 : f32 to vector<1x128xf32>
    %37 = arith.addf %36, %35 : vector<1x128xf32>
    %38 = arith.divf %36, %37 : vector<1x128xf32>
    %39 = vector.extract_strided_slice %21 {offsets = [0, 256], sizes = [1, 128], strides = [1, 1]} : vector<1x384xf32> to vector<1x128xf32>
    %40 = vector.extract_strided_slice %19 {offsets = [0, 256], sizes = [1, 128], strides = [1, 1]} : vector<1x384xf32> to vector<1x128xf32>
    %41 = arith.mulf %30, %40 : vector<1x128xf32>
    %42 = arith.addf %39, %41 : vector<1x128xf32>
    %43 = math.tanh %42 : vector<1x128xf32>
    %cst_19 = arith.constant 1.000000e+00 : f32
    %44 = vector.broadcast %cst_19 : f32 to vector<1x128xf32>
    %45 = arith.subf %44, %38 : vector<1x128xf32>
    %46 = arith.mulf %45, %43 : vector<1x128xf32>
    %47 = arith.mulf %38, %22 : vector<1x128xf32>
    %48 = arith.addf %46, %47 : vector<1x128xf32>
    %c0_20 = arith.constant 0 : index
    %c0_21 = arith.constant 0 : index
    %49 = vector.load %arg8[%c0_20, %c0_21] : memref<2x128xf32, #tpu.memory_space<vmem>>, vector<1x128xf32>
    tpu.vector_store %arg8[%c0_20, %c0_21], %48 {strides = array<i32>} : memref<2x128xf32, #tpu.memory_space<vmem>>, vector<1x128xf32>,
    %cst_22 = arith.constant dense<0.000000e+00> : vector<1x384xf32>
    %50 = tpu.matmul %48, %20, %cst_22 {dimension_numbers = #tpu.dot_dimension_numbers<[1], [0], [0], [1], [0, 0, 1, 1], [], []>} : vector<1x128xf32>, vector<128x384xf32>, vector<1x384xf32> -> vector<1x384xf32>
    %51 = arith.addf %50, %19 : vector<1x384xf32>
    %52 = vector.extract_strided_slice %18 {offsets = [1, 0], sizes = [1, 384], strides = [1, 1]} : vector<2x384xf32> to vector<1x384xf32>
    %53 = vector.extract_strided_slice %52 {offsets = [0, 0], sizes = [1, 128], strides = [1, 1]} : vector<1x384xf32> to vector<1x128xf32>
    %54 = vector.extract_strided_slice %51 {offsets = [0, 0], sizes = [1, 128], strides = [1, 1]} : vector<1x384xf32> to vector<1x128xf32>
    %55 = arith.addf %53, %54 : vector<1x128xf32>
    %56 = arith.negf %55 : vector<1x128xf32>
    %57 = math.exp %56 : vector<1x128xf32>
    %cst_23 = arith.constant 1.000000e+00 : f32
    %58 = vector.broadcast %cst_23 : f32 to vector<1x128xf32>
    %59 = arith.addf %58, %57 : vector<1x128xf32>
    %60 = arith.divf %58, %59 : vector<1x128xf32>
    %61 = vector.extract_strided_slice %52 {offsets = [0, 128], sizes = [1, 128], strides = [1, 1]} : vector<1x384xf32> to vector<1x128xf32>
    %62 = vector.extract_strided_slice %51 {offsets = [0, 128], sizes = [1, 128], strides = [1, 1]} : vector<1x384xf32> to vector<1x128xf32>
    %63 = arith.addf %61, %62 : vector<1x128xf32>
    %64 = arith.negf %63 : vector<1x128xf32>
    %65 = math.exp %64 : vector<1x128xf32>
    %cst_24 = arith.constant 1.000000e+00 : f32
    %66 = vector.broadcast %cst_24 : f32 to vector<1x128xf32>
    %67 = arith.addf %66, %65 : vector<1x128xf32>
    %68 = arith.divf %66, %67 : vector<1x128xf32>
    %69 = vector.extract_strided_slice %52 {offsets = [0, 256], sizes = [1, 128], strides = [1, 1]} : vector<1x384xf32> to vector<1x128xf32>
    %70 = vector.extract_strided_slice %51 {offsets = [0, 256], sizes = [1, 128], strides = [1, 1]} : vector<1x384xf32> to vector<1x128xf32>
    %71 = arith.mulf %60, %70 : vector<1x128xf32>
    %72 = arith.addf %69, %71 : vector<1x128xf32>
    %73 = math.tanh %72 : vector<1x128xf32>
    %cst_25 = arith.constant 1.000000e+00 : f32
    %74 = vector.broadcast %cst_25 : f32 to vector<1x128xf32>
    %75 = arith.subf %74, %68 : vector<1x128xf32>
    %76 = arith.mulf %75, %73 : vector<1x128xf32>
    %77 = arith.mulf %68, %48 : vector<1x128xf32>
    %78 = arith.addf %76, %77 : vector<1x128xf32>
    %c1 = arith.constant 1 : index
    %c0_26 = arith.constant 0 : index
    %79 = vector.load %arg8[%c1, %c0_26] : memref<2x128xf32, #tpu.memory_space<vmem>>, vector<1x128xf32>
    tpu.vector_store %arg8[%c1, %c0_26], %78 {strides = array<i32>} : memref<2x128xf32, #tpu.memory_space<vmem>>, vector<1x128xf32>,
    %c0_27 = arith.constant 0 : index
    %c0_28 = arith.constant 0 : index
    %80 = vector.load %arg8[%c0_27, %c0_28] : memref<2x128xf32, #tpu.memory_space<vmem>>, vector<2x128xf32>
    %c0_29 = arith.constant 0 : index
    %c0_30 = arith.constant 0 : index
    %81 = vector.load %arg3[%c0_29, %c0_30] : memref<128x128xf32, #tpu.memory_space<vmem>>, vector<128x128xf32>
    %cst_31 = arith.constant dense<0.000000e+00> : vector<2x128xf32>
    %82 = tpu.matmul %80, %81, %cst_31 {dimension_numbers = #tpu.dot_dimension_numbers<[1], [0], [0], [1], [0, 0, 1, 1], [], []>} : vector<2x128xf32>, vector<128x128xf32>, vector<2x128xf32> -> vector<2x128xf32>
    %c0_32 = arith.constant 0 : index
    %c1024 = arith.constant 1024 : index
    %83 = vector.load %arg6[%c0_32, %c1024] : memref<1x1536xf32, #tpu.memory_space<vmem>>, vector<1x128xf32>
    %84 = vector.broadcast %83 : vector<1x128xf32> to vector<2x128xf32>
    %85 = arith.addf %82, %84 : vector<2x128xf32>
    %cst_33 = arith.constant 0.000000e+00 : f32
    %86 = vector.broadcast %cst_33 : f32 to vector<2x128xf32>
    %87 = arith.maximumf %85, %86 : vector<2x128xf32>
    %88 = tpu.concatenate %87, %80 in 1 : vector<2x128xf32>, vector<2x128xf32> -> vector<2x256xf32>
    %c0_34 = arith.constant 0 : index
    %c0_35 = arith.constant 0 : index
    %89 = vector.load %arg4[%c0_34, %c0_35] : memref<256x64xf32, #tpu.memory_space<vmem>>, vector<256x64xf32>
    %cst_36 = arith.constant dense<0.000000e+00> : vector<2x64xf32>
    %90 = tpu.matmul %88, %89, %cst_36 {dimension_numbers = #tpu.dot_dimension_numbers<[1], [0], [0], [1], [0, 0, 1, 1], [], []>} : vector<2x256xf32>, vector<256x64xf32>, vector<2x64xf32> -> vector<2x64xf32>
    %c0_37 = arith.constant 0 : index
    %c1152 = arith.constant 1152 : index
    %91 = vector.load %arg6[%c0_37, %c1152] : memref<1x1536xf32, #tpu.memory_space<vmem>>, vector<1x64xf32>
    %92 = vector.broadcast %91 : vector<1x64xf32> to vector<2x64xf32>
    %93 = arith.addf %90, %92 : vector<2x64xf32>
    %c88 = arith.constant 88 : index
    %c0_38 = arith.constant 0 : index
    %94 = vector.load %arg5[%c88, %c0_38] : memref<376x128xf32, #tpu.memory_space<vmem>>, vector<64x128xf32>
    %cst_39 = arith.constant dense<0.000000e+00> : vector<2x128xf32>
    %95 = tpu.matmul %93, %94, %cst_39 {dimension_numbers = #tpu.dot_dimension_numbers<[1], [0], [0], [1], [0, 0, 1, 1], [], []>} : vector<2x64xf32>, vector<64x128xf32>, vector<2x128xf32> -> vector<2x128xf32>
    %c0_40 = arith.constant 0 : index
    %c1280 = arith.constant 1280 : index
    %96 = vector.load %arg6[%c0_40, %c1280] : memref<1x1536xf32, #tpu.memory_space<vmem>>, vector<1x128xf32>
    %97 = vector.broadcast %96 : vector<1x128xf32> to vector<2x128xf32>
    %98 = arith.addf %95, %97 : vector<2x128xf32>
    %cst_41 = arith.constant 0.000000e+00 : f32
    %99 = vector.broadcast %cst_41 : f32 to vector<2x128xf32>
    %100 = arith.maximumf %98, %99 : vector<2x128xf32>
    %c152 = arith.constant 152 : index
    %c0_42 = arith.constant 0 : index
    %101 = vector.load %arg5[%c152, %c0_42] : memref<376x128xf32, #tpu.memory_space<vmem>>, vector<224x16xf32>
    %102 = tpu.concatenate %100, %93, %0 in 1 : vector<2x128xf32>, vector<2x64xf32>, vector<2x32xf32> -> vector<2x224xf32>
    %cst_43 = arith.constant dense<0.000000e+00> : vector<2x16xf32>
    %103 = tpu.matmul %102, %101, %cst_43 {dimension_numbers = #tpu.dot_dimension_numbers<[1], [0], [0], [1], [0, 0, 1, 1], [], []>} : vector<2x224xf32>, vector<224x16xf32>, vector<2x16xf32> -> vector<2x16xf32>
    %c0_44 = arith.constant 0 : index
    %c1408 = arith.constant 1408 : index
    %104 = vector.load %arg6[%c0_44, %c1408] : memref<1x1536xf32, #tpu.memory_space<vmem>>, vector<1x16xf32>
    %105 = vector.broadcast %104 : vector<1x16xf32> to vector<2x16xf32>
    %106 = arith.addf %103, %105 : vector<2x16xf32>
    %c0_45 = arith.constant 0 : index
    %c0_46 = arith.constant 0 : index
    %107 = vector.load %arg7[%c0_45, %c0_46] : memref<2x16xf32, #tpu.memory_space<vmem>>, vector<2x16xf32>
    tpu.vector_store %arg7[%c0_45, %c0_46], %106 {strides = array<i32>} : memref<2x16xf32, #tpu.memory_space<vmem>>, vector<2x16xf32>,
    return
  }
}

</mosaic_0001>

<llo_original>
// kernel: tile.13
$region0: #{tile.13}
  #allocation0 [shape = 's32[1]{0}', space=sflag, size = 0x4, scoped, tag = 'scoped memory for tile.13']
  %s0 = inlined_call_operand.vmem [shape: f32[32], index: 0, kind: input, shape index: {}]
  %s1 = inlined_call_operand.vmem [shape: f32[4,32], index: 1, kind: output, shape index: {}]
  // Predicated region
  $region2: #{tile.13} parent=0 // pred_check
    _
  $region3: #{tile.13} parent=0 // pred_check_branch
    %3 = sbr.rel (0) target = $region5
  $region4: #{tile.13} parent=0 // pred_region
    _
  $region5: #{tile.13} parent=0 // pred_fallthru
    _
  %v4 = vld [vmem:[%s0] ss:$0 sm:$0xff]
  %5 = vst [vmem:[%s1] sm:$0xf] %v4

// kernel: tile.14
$region0: #{tile.14}
  %s0 = inlined_call_operand.vmem [shape: f32[4,32], index: 0, kind: input, shape index: {}]
  %s1 = inlined_call_operand.vmem [shape: f32[128], index: 1, kind: output, shape index: {}]
  $region1: #{tile.14} parent=0
    #allocation0 [shape = 'u8[4096]{0}', space=vmem, size = 0x1000, scoped, tag = 'scoped mem for output reshape']
    #allocation1 [shape = 'u8[4096]{0}', space=vmem, size = 0x1000, scoped, tag = 'scoped mem for input reshape']
    %s3 = sshllo.u32 0, 4
    %v4 = vld [vmem:[%s0] sm:%s3]
    %5 = vst [vmem:[#allocation1] sm:%s3] %v4
    %v6 = vld [vmem:[#allocation1] sm:$0x1]
    %vm7 = vcmask 261120
    %8 = vst.msk [vmem:[#allocation0] sm:$0x1] %vm7, %v6
    %s9 = scalar_lea.vmem [#allocation1], 3
    %v10 = vld [vmem:[%s9] sm:$0x1]
    %11 = vrot.lane.b32.xlu0 %v10, 96
    %v12 = vpop.permute.xlu0 %11
    %vm13 = vcmask 1048320
    %14 = vst.msk [vmem:[#allocation0] sm:$0x1] %vm13, %v12
    %s15 = scalar_lea.vmem [#allocation1], 2
    %v16 = vld [vmem:[%s15] sm:$0x1]
    %17 = vrot.lane.b32.xlu0 %v16, 64
    %v18 = vpop.permute.xlu0 %17
    %vm19 = vcmask 785920
    %20 = vst.msk [vmem:[#allocation0] sm:$0x1] %vm19, %v18
    %s21 = scalar_lea.vmem [#allocation1], 1
    %v22 = vld [vmem:[%s21] sm:$0x1]
    %23 = vrot.lane.b32.xlu0 %v22, 32
    %v24 = vpop.permute.xlu0 %23
    %vm25 = vcmask 523520
    %26 = vst.msk [vmem:[#allocation0] sm:$0x1] %vm25, %v24
    %s28 = sshllo.u32 0, 1
    %v30 = vld [vmem:[#allocation0] sm:%s28]
    %s31 = sshllo.u32 0, 1
    %32 = vst [vmem:[%s1] sm:%s31] %v30

// kernel: custom-call
$region0: #{custom-call}
  %s0 = inlined_call_operand.vmem [shape: f32[1536], index: 0, kind: output, shape index: {}]

// kernel: model_forward.1
$region0: #{model_forward.1}
  #allocation0 [shape = 'u32[]', space=smem, size = 0x4, offset = 0x4, fixed_abs, tag = 'smem constant byte address 0x4 - core index']
  #allocation1 [shape = 'u32[144,128]{1,0:T(1,128)}', space=vmem, size = 0x12000, scoped, tag = 'internal scratch']
  #allocation2 [shape = 'f32[2,128]{1,0:T(2,128)}', space=vmem, size = 0x400, scoped, tag = 'scratch operand']
  %s0 = inlined_call_operand.vmem [shape: f32[2,32], index: 0, kind: input, shape index: {}]
  %s1 = inlined_call_operand.vmem [shape: f32[36,384], index: 1, kind: input, shape index: {}]
  %s2 = inlined_call_operand.vmem [shape: f32[128,384], index: 2, kind: input, shape index: {}]
  %s3 = inlined_call_operand.vmem [shape: f32[128,128], index: 3, kind: input, shape index: {}]
  %s4 = inlined_call_operand.vmem [shape: f32[256,64], index: 4, kind: input, shape index: {}]
  %s5 = inlined_call_operand.vmem [shape: f32[376,128], index: 5, kind: input, shape index: {}]
  %s6 = inlined_call_operand.vmem [shape: f32[1,1536], index: 6, kind: input, shape index: {}]
  %s7 = inlined_call_operand.vmem [shape: f32[2,16], index: 7, kind: output, shape index: {}]
  %s8 = sld [smem:[#allocation0]]
  $region38: #{model_forward.1} parent=0
    _
  %s10 = ssub.s32 1, %s8
  %s11 = scalar_select 0, %s10, %s8
  // Predicated region
  $region2: #{model_forward.1} parent=0 // pred_check
    _
  $region3: #{model_forward.1} parent=0 // pred_check_branch
    %13 = sbr.rel (0) target = $region5
  $region4: #{model_forward.1} parent=0 // pred_region
    _
  $region5: #{model_forward.1} parent=0 // pred_fallthru
    _
  // Predicated region
  $region6: #{model_forward.1} parent=0 // pred_check
    _
  $region7: #{model_forward.1} parent=0 // pred_check_branch
    %15 = sbr.rel (0) target = $region9
  $region8: #{model_forward.1} parent=0 // pred_region
    _
  $region9: #{model_forward.1} parent=0 // pred_fallthru
    _
  // Predicated region
  $region10: #{model_forward.1} parent=0 // pred_check
    _
  $region11: #{model_forward.1} parent=0 // pred_check_branch
    %17 = sbr.rel (0) target = $region13
  $region12: #{model_forward.1} parent=0 // pred_region
    _
  $region13: #{model_forward.1} parent=0 // pred_fallthru
    _
  // Predicated region
  $region14: #{model_forward.1} parent=0 // pred_check
    _
  $region15: #{model_forward.1} parent=0 // pred_check_branch
    %19 = sbr.rel (0) target = $region17
  $region16: #{model_forward.1} parent=0 // pred_region
    _
  $region17: #{model_forward.1} parent=0 // pred_fallthru
    _
  // Predicated region
  $region18: #{model_forward.1} parent=0 // pred_check
    _
  $region19: #{model_forward.1} parent=0 // pred_check_branch
    %21 = sbr.rel (0) target = $region21
  $region20: #{model_forward.1} parent=0 // pred_region
    _
  $region21: #{model_forward.1} parent=0 // pred_fallthru
    _
  // Predicated region
  $region22: #{model_forward.1} parent=0 // pred_check
    _
  $region23: #{model_forward.1} parent=0 // pred_check_branch
    %23 = sbr.rel (0) target = $region25
  $region24: #{model_forward.1} parent=0 // pred_region
    _
  $region25: #{model_forward.1} parent=0 // pred_fallthru
    _
  // Predicated region
  $region26: #{model_forward.1} parent=0 // pred_check
    _
  $region27: #{model_forward.1} parent=0 // pred_check_branch
    %25 = sbr.rel (0) target = $region29
  $region28: #{model_forward.1} parent=0 // pred_region
    _
  $region29: #{model_forward.1} parent=0 // pred_fallthru
    _
  %v26 = vld [vmem:[%s0] sm:$0x3]
  %v27 = vld [vmem:[%s5] sm:$0xff]
  %v28 = vld [vmem:[%s5 + $0x8] sm:$0xff]
  %v29 = vld [vmem:[%s5 + $0x10] sm:$0xff]
  %v30 = vld [vmem:[%s5 + $0x18] sm:$0xff]
  %v31 = vld [vmem:[%s6] sm:$0x1]
  %v33 = vlaneseq
  %v34 = vshrl.u32 %v33, 7
  %v35 = vsub.s32 0, %v34
  %v36 = vrot.slane %v31, %v35
  %vm38 = vcmask 261120
  %v40 = vsel %vm38, %v26, 0
  %42 = vmatprep.subr.mxu0 0.0
  %43 = vmatpush1.msra.mxu0 %v27
  %44 = vmatprep.subr.mxu0 0.0
  %45 = vmatpush1.msra.mxu0 %v28
  %46 = vmatprep.subr.mxu0 0.0
  %47 = vmatpush1.msra.mxu0 %v29
  %48 = vmatprep.subr.mxu0 0.0
  %49 = vmatpush1.msra.mxu0 %v30
  %50 = vmatprep.subr.mxu0 0.0
  %51 = vmatpush1.msra.mxu0 0.0
  %52 = vmatprep.subr.mxu0 0.0
  %53 = vmatpush1.msra.mxu0 0.0
  %54 = vmatprep.subr.mxu0 0.0
  %55 = vmatpush1.msra.mxu0 0.0
  %56 = vmatprep.subr.mxu0 0.0
  %57 = vmatpush1.msra.mxu0 0.0
  %58 = vmatprep.subr.mxu0 0.0
  %59 = vmatpush1.msra.mxu0 0.0
  %60 = vmatprep.subr.mxu0 0.0
  %61 = vmatpush1.msra.mxu0 0.0
  %62 = vmatprep.subr.mxu0 0.0
  %63 = vmatpush1.msra.mxu0 0.0
  %64 = vmatprep.subr.mxu0 0.0
  %65 = vmatpush1.msra.mxu0 0.0
  %66 = vmatprep.subr.mxu0 0.0
  %67 = vmatpush1.msra.mxu0 0.0
  %68 = vmatprep.subr.mxu0 0.0
  %69 = vmatpush1.msra.mxu0 0.0
  %70 = vmatprep.subr.mxu0 0.0
  %71 = vmatpush1.msra.mxu0 0.0
  %72 = vmatprep.subr.mxu0 0.0
  %73 = vmatpush1.msra.mxu0 0.0
  %74 = vmatprep.subr.mxu0 0.0
  %75 = vmatpush1.msra.mxu0 0.0
  %76 = vmatprep.subr.mxu0 0.0
  %77 = vmatpush1.msra.mxu0 0.0
  %78 = vmatprep.subr.mxu0 0.0
  %79 = vmatpush1.msra.mxu0 0.0
  %80 = vmatprep.subr.mxu0 0.0
  %81 = vmatpush1.msra.mxu0 0.0
  %82 = vmatprep.subr.mxu0 0.0
  %83 = vmatpush1.msra.mxu0 0.0
  %84 = vmatprep.subr.mxu0 0.0
  %85 = vmatpush1.msra.mxu0 0.0
  %86 = vmatprep.subr.mxu0 0.0
  %87 = vmatpush1.msra.mxu0 0.0
  %88 = vmatprep.subr.mxu0 0.0
  %89 = vmatpush1.msra.mxu0 0.0
  %90 = vmatprep.subr.mxu0 0.0
  %91 = vmatpush1.msra.mxu0 0.0
  %92 = vmatprep.subr.mxu0 0.0
  %93 = vmatpush1.msra.mxu0 0.0
  %94 = vmatprep.subr.mxu0 0.0
  %95 = vmatpush1.msra.mxu0 0.0
  %96 = vmatprep.subr.mxu0 0.0
  %97 = vmatpush1.msra.mxu0 0.0
  %98 = vmatprep.subr.mxu0 0.0
  %99 = vmatpush1.msra.mxu0 0.0
  %100 = vmatprep.subr.mxu0 0.0
  %101 = vmatpush1.msra.mxu0 0.0
  %102 = vmatprep.subr.mxu0 0.0
  %103 = vmatpush1.msra.mxu0 0.0
  %104 = vmatprep.subr.mxu0 0.0
  %105 = vmatpush1.msra.mxu0 0.0
  %106 = vmatprep.mubr.f32.mxu0 0.0
  %107 = vmatmul.mubr.f32.gmra.mrb[0].mxu0 %v40
  %v108 = vpop.f32.mrb[0].mxu0
  %v109 = vadd.f32 %v36, %v108
  %v110 = vpop.f32.mrb[0].mxu0
  %111 = vdwg.mxu0
  %v112 = vmax.f32 %v109, 0.0
  %v113 = vld [vmem:[%s5 + $0x20] sm:$0xff]
  %v114 = vld [vmem:[%s5 + $0x28] sm:$0xff]
  %v115 = vld [vmem:[%s5 + $0x30] sm:$0xff]
  %v116 = vld [vmem:[%s5 + $0x38] sm:$0xff]
  %v117 = vld [vmem:[%s5 + $0x40] sm:$0xff]
  %v118 = vld [vmem:[%s5 + $0x48] sm:$0xff]
  %v119 = vld [vmem:[%s5 + $0x50] sm:$0xff]
  %v120 = vld [vmem:[%s6 + $0x1] sm:$0x1]
  %v122 = vlaneseq
  %v123 = vshrl.u32 %v122, 7
  %v124 = vsub.s32 0, %v123
  %v125 = vrot.slane %v120, %v124
  %vm127 = vcmask 457728
  %v129 = vsel %vm127, %v112, 0
  %131 = vmatprep.subr.mxu0 0.0
  %132 = vmatpush1.msra.mxu0 %v113
  %133 = vmatprep.subr.mxu0 0.0
  %134 = vmatpush1.msra.mxu0 %v114
  %135 = vmatprep.subr.mxu0 0.0
  %136 = vmatpush1.msra.mxu0 %v115
  %137 = vmatprep.subr.mxu0 0.0
  %138 = vmatpush1.msra.mxu0 %v116
  %139 = vmatprep.subr.mxu0 0.0
  %140 = vmatpush1.msra.mxu0 %v117
  %141 = vmatprep.subr.mxu0 0.0
  %142 = vmatpush1.msra.mxu0 %v118
  %143 = vmatprep.subr.mxu0 0.0
  %144 = vmatpush1.msra.mxu0 %v119
  %145 = vmatprep.subr.mxu0 0.0
  %146 = vmatpush1.msra.mxu0 0.0
  %147 = vmatprep.subr.mxu0 0.0
  %148 = vmatpush1.msra.mxu0 0.0
  %149 = vmatprep.subr.mxu0 0.0
  %150 = vmatpush1.msra.mxu0 0.0
  %151 = vmatprep.subr.mxu0 0.0
  %152 = vmatpush1.msra.mxu0 0.0
  %153 = vmatprep.subr.mxu0 0.0
  %154 = vmatpush1.msra.mxu0 0.0
  %155 = vmatprep.subr.mxu0 0.0
  %156 = vmatpush1.msra.mxu0 0.0
  %157 = vmatprep.subr.mxu0 0.0
  %158 = vmatpush1.msra.mxu0 0.0
  %159 = vmatprep.subr.mxu0 0.0
  %160 = vmatpush1.msra.mxu0 0.0
  %161 = vmatprep.subr.mxu0 0.0
  %162 = vmatpush1.msra.mxu0 0.0
  %163 = vmatprep.subr.mxu0 0.0
  %164 = vmatpush1.msra.mxu0 0.0
  %165 = vmatprep.subr.mxu0 0.0
  %166 = vmatpush1.msra.mxu0 0.0
  %167 = vmatprep.subr.mxu0 0.0
  %168 = vmatpush1.msra.mxu0 0.0
  %169 = vmatprep.subr.mxu0 0.0
  %170 = vmatpush1.msra.mxu0 0.0
  %171 = vmatprep.subr.mxu0 0.0
  %172 = vmatpush1.msra.mxu0 0.0
  %173 = vmatprep.subr.mxu0 0.0
  %174 = vmatpush1.msra.mxu0 0.0
  %175 = vmatprep.subr.mxu0 0.0
  %176 = vmatpush1.msra.mxu0 0.0
  %177 = vmatprep.subr.mxu0 0.0
  %178 = vmatpush1.msra.mxu0 0.0
  %179 = vmatprep.subr.mxu0 0.0
  %180 = vmatpush1.msra.mxu0 0.0
  %181 = vmatprep.subr.mxu0 0.0
  %182 = vmatpush1.msra.mxu0 0.0
  %183 = vmatprep.subr.mxu0 0.0
  %184 = vmatpush1.msra.mxu0 0.0
  %185 = vmatprep.subr.mxu0 0.0
  %186 = vmatpush1.msra.mxu0 0.0
  %187 = vmatprep.subr.mxu0 0.0
  %188 = vmatpush1.msra.mxu0 0.0
  %189 = vmatprep.subr.mxu0 0.0
  %190 = vmatpush1.msra.mxu0 0.0
  %191 = vmatprep.subr.mxu0 0.0
  %192 = vmatpush1.msra.mxu0 0.0
  %193 = vmatprep.subr.mxu0 0.0
  %194 = vmatpush1.msra.mxu0 0.0
  %195 = vmatprep.mubr.f32.mxu0 0.0
  %196 = vmatmul.mubr.f32.gmra.mrb[0].mxu0 %v129
  %v197 = vpop.f32.mrb[0].mxu0
  %v198 = vadd.f32 %v125, %v197
  %v199 = vpop.f32.mrb[0].mxu0
  %200 = vdwg.mxu0
  %202 = vrot.lane.b32.xlu0 %v198, 32
  %v203 = vpop.permute.xlu0 %202
  %v205 = vsel %vm38, %v26, %v203
  %v206 = vld [vmem:[%s1] sm:$0xff]
  %v207 = vld [vmem:[%s1 + $0x8] sm:$0xff]
  %v208 = vld [vmem:[%s1 + $0x10] sm:$0xff]
  %v209 = vld [vmem:[%s1 + $0x18] sm:$0xff]
  %v210 = vld [vmem:[%s1 + $0x20] sm:$0xff]
  %v211 = vld [vmem:[%s1 + $0x28] sm:$0xff]
  %v212 = vld [vmem:[%s1 + $0x30] sm:$0xff]
  %v213 = vld [vmem:[%s1 + $0x38] sm:$0xff]
  %v214 = vld [vmem:[%s1 + $0x40] sm:$0xff]
  %v215 = vld [vmem:[%s1 + $0x48] sm:$0xff]
  %v216 = vld [vmem:[%s1 + $0x50] sm:$0xff]
  %v217 = vld [vmem:[%s1 + $0x58] sm:$0xff]
  %v218 = vld [vmem:[%s1 + $0x60] sm:$0xf]
  %v219 = vld [vmem:[%s1 + $0x68] sm:$0xf]
  %v220 = vld [vmem:[%s1 + $0x70] sm:$0xf]
  %v221 = vld [vmem:[%s6 + $0x2] sm:$0x7]
  %v223 = vlaneseq
  %v224 = vshrl.u32 %v223, 7
  %v225 = vsub.s32 0, %v224
  %v226 = vrot.slane %v221, %v225
  %v227 = vlaneseq
  %v228 = vshrl.u32 %v227, 7
  %v229 = vsub.s32 1, %v228
  %v230 = vrot.slane %v221, %v229
  %v231 = vlaneseq
  %v232 = vshrl.u32 %v231, 7
  %v233 = vsub.s32 2, %v232
  %v234 = vrot.slane %v221, %v233
  %vm238 = vcmask 293888
  %v240 = vsel %vm238, %v205, 0
  %vm242 = vcmask 1043456
  %v244 = vsel %vm242, %v218, 0
  %v247 = vsel %vm242, %v219, 0
  %v250 = vsel %vm242, %v220, 0
  %252 = vmatprep.subr.mxu0 %v207
  %253 = vmatpush1.msra.mxu0 %v206
  %254 = vmatprep.subr.mxu0 %v210
  %255 = vmatpush1.msra.mxu0 %v209
  %256 = vmatprep.subr.mxu0 %v213
  %257 = vmatpush1.msra.mxu0 %v212
  %258 = vmatprep.subr.mxu0 %v216
  %259 = vmatpush1.msra.mxu0 %v215
  %260 = vmatprep.subr.mxu0 %v247
  %261 = vmatpush1.msra.mxu0 %v244
  %262 = vmatprep.subr.mxu0 0.0
  %263 = vmatpush1.msra.mxu0 0.0
  %264 = vmatprep.subr.mxu0 0.0
  %265 = vmatpush1.msra.mxu0 0.0
  %266 = vmatprep.subr.mxu0 0.0
  %267 = vmatpush1.msra.mxu0 0.0
  %268 = vmatprep.subr.mxu0 0.0
  %269 = vmatpush1.msra.mxu0 0.0
  %270 = vmatprep.subr.mxu0 0.0
  %271 = vmatpush1.msra.mxu0 0.0
  %272 = vmatprep.subr.mxu0 0.0
  %273 = vmatpush1.msra.mxu0 0.0
  %274 = vmatprep.subr.mxu0 0.0
  %275 = vmatpush1.msra.mxu0 0.0
  %276 = vmatprep.subr.mxu0 0.0
  %277 = vmatpush1.msra.mxu0 0.0
  %278 = vmatprep.subr.mxu0 0.0
  %279 = vmatpush1.msra.mxu0 0.0
  %280 = vmatprep.subr.mxu0 0.0
  %281 = vmatpush1.msra.mxu0 0.0
  %282 = vmatprep.subr.mxu0 0.0
  %283 = vmatpush1.msra.mxu0 0.0
  %284 = vmatprep.subr.mxu0 0.0
  %285 = vmatpush1.msra.mxu0 0.0
  %286 = vmatprep.subr.mxu0 0.0
  %287 = vmatpush1.msra.mxu0 0.0
  %288 = vmatprep.subr.mxu0 0.0
  %289 = vmatpush1.msra.mxu0 0.0
  %290 = vmatprep.subr.mxu0 0.0
  %291 = vmatpush1.msra.mxu0 0.0
  %292 = vmatprep.subr.mxu0 0.0
  %293 = vmatpush1.msra.mxu0 0.0
  %294 = vmatprep.subr.mxu0 0.0
  %295 = vmatpush1.msra.mxu0 0.0
  %296 = vmatprep.subr.mxu0 0.0
  %297 = vmatpush1.msra.mxu0 0.0
  %298 = vmatprep.subr.mxu0 0.0
  %299 = vmatpush1.msra.mxu0 0.0
  %300 = vmatprep.subr.mxu0 0.0
  %301 = vmatpush1.msra.mxu0 0.0
  %302 = vmatprep.subr.mxu0 0.0
  %303 = vmatpush1.msra.mxu0 0.0
  %304 = vmatprep.subr.mxu0 0.0
  %305 = vmatpush1.msra.mxu0 0.0
  %306 = vmatprep.subr.mxu0 0.0
  %307 = vmatpush1.msra.mxu0 0.0
  %308 = vmatprep.subr.mxu0 0.0
  %309 = vmatpush1.msra.mxu0 0.0
  %310 = vmatprep.subr.mxu0 0.0
  %311 = vmatpush1.msra.mxu0 0.0
  %312 = vmatprep.subr.mxu0 0.0
  %313 = vmatpush1.msra.mxu0 0.0
  %314 = vmatprep.subr.mxu0 0.0
  %315 = vmatpush1.msra.mxu0 0.0
  %316 = vmatprep.mubr.f32.mxu0 0.0
  %317 = vmatmul.mubr.f32.gmra.mrb[0].mxu0 %v240
  %v318 = vpop.f32.mrb[0].mxu0
  %v319 = vadd.f32 %v226, %v318
  %v320 = vpop.f32.mrb[0].mxu0
  %v321 = vadd.f32 %v230, %v320
  %322 = vdwg.mxu0
  %323 = vmatprep.subr.mxu0 0.0
  %324 = vmatpush1.msra.mxu0 %v208
  %325 = vmatprep.subr.mxu0 0.0
  %326 = vmatpush1.msra.mxu0 %v211
  %327 = vmatprep.subr.mxu0 0.0
  %328 = vmatpush1.msra.mxu0 %v214
  %329 = vmatprep.subr.mxu0 0.0
  %330 = vmatpush1.msra.mxu0 %v217
  %331 = vmatprep.subr.mxu0 0.0
  %332 = vmatpush1.msra.mxu0 %v250
  %333 = vmatprep.subr.mxu0 0.0
  %334 = vmatpush1.msra.mxu0 0.0
  %335 = vmatprep.subr.mxu0 0.0
  %336 = vmatpush1.msra.mxu0 0.0
  %337 = vmatprep.subr.mxu0 0.0
  %338 = vmatpush1.msra.mxu0 0.0
  %339 = vmatprep.subr.mxu0 0.0
  %340 = vmatpush1.msra.mxu0 0.0
  %341 = vmatprep.subr.mxu0 0.0
  %342 = vmatpush1.msra.mxu0 0.0
  %343 = vmatprep.subr.mxu0 0.0
  %344 = vmatpush1.msra.mxu0 0.0
  %345 = vmatprep.subr.mxu0 0.0
  %346 = vmatpush1.msra.mxu0 0.0
  %347 = vmatprep.subr.mxu0 0.0
  %348 = vmatpush1.msra.mxu0 0.0
  %349 = vmatprep.subr.mxu0 0.0
  %350 = vmatpush1.msra.mxu0 0.0
  %351 = vmatprep.subr.mxu0 0.0
  %352 = vmatpush1.msra.mxu0 0.0
  %353 = vmatprep.subr.mxu0 0.0
  %354 = vmatpush1.msra.mxu0 0.0
  %355 = vmatprep.subr.mxu0 0.0
  %356 = vmatpush1.msra.mxu0 0.0
  %357 = vmatprep.subr.mxu0 0.0
  %358 = vmatpush1.msra.mxu0 0.0
  %359 = vmatprep.subr.mxu0 0.0
  %360 = vmatpush1.msra.mxu0 0.0
  %361 = vmatprep.subr.mxu0 0.0
  %362 = vmatpush1.msra.mxu0 0.0
  %363 = vmatprep.subr.mxu0 0.0
  %364 = vmatpush1.msra.mxu0 0.0
  %365 = vmatprep.subr.mxu0 0.0
  %366 = vmatpush1.msra.mxu0 0.0
  %367 = vmatprep.subr.mxu0 0.0
  %368 = vmatpush1.msra.mxu0 0.0
  %369 = vmatprep.subr.mxu0 0.0
  %370 = vmatpush1.msra.mxu0 0.0
  %371 = vmatprep.subr.mxu0 0.0
  %372 = vmatpush1.msra.mxu0 0.0
  %373 = vmatprep.subr.mxu0 0.0
  %374 = vmatpush1.msra.mxu0 0.0
  %375 = vmatprep.subr.mxu0 0.0
  %376 = vmatpush1.msra.mxu0 0.0
  %377 = vmatprep.subr.mxu0 0.0
  %378 = vmatpush1.msra.mxu0 0.0
  %379 = vmatprep.subr.mxu0 0.0
  %380 = vmatpush1.msra.mxu0 0.0
  %381 = vmatprep.subr.mxu0 0.0
  %382 = vmatpush1.msra.mxu0 0.0
  %383 = vmatprep.subr.mxu0 0.0
  %384 = vmatpush1.msra.mxu0 0.0
  %385 = vmatprep.subr.mxu0 0.0
  %386 = vmatpush1.msra.mxu0 0.0
  %387 = vmatprep.mubr.f32.mxu0 0.0
  %388 = vmatmul.mubr.f32.gmra.mrb[0].mxu0 %v240
  %v389 = vpop.f32.mrb[0].mxu0
  %v390 = vadd.f32 %v234, %v389
  %v391 = vpop.f32.mrb[0].mxu0
  %392 = vdwg.mxu0
  %v393 = vld [vmem:[%s6 + $0x5] sm:$0x7]
  %v394 = vld [vmem:[%s2] sm:$0xff]
  %v395 = vld [vmem:[%s2 + $0x8] sm:$0xff]
  %v396 = vld [vmem:[%s2 + $0x10] sm:$0xff]
  %v397 = vld [vmem:[%s2 + $0x18] sm:$0xff]
  %v398 = vld [vmem:[%s2 + $0x20] sm:$0xff]
  %v399 = vld [vmem:[%s2 + $0x28] sm:$0xff]
  %v400 = vld [vmem:[%s2 + $0x30] sm:$0xff]
  %v401 = vld [vmem:[%s2 + $0x38] sm:$0xff]
  %v402 = vld [vmem:[%s2 + $0x40] sm:$0xff]
  %v403 = vld [vmem:[%s2 + $0x48] sm:$0xff]
  %v404 = vld [vmem:[%s2 + $0x50] sm:$0xff]
  %v405 = vld [vmem:[%s2 + $0x58] sm:$0xff]
  %v406 = vld [vmem:[%s2 + $0x60] sm:$0xff]
  %v407 = vld [vmem:[%s2 + $0x68] sm:$0xff]
  %v408 = vld [vmem:[%s2 + $0x70] sm:$0xff]
  %v409 = vld [vmem:[%s2 + $0x78] sm:$0xff]
  %v410 = vld [vmem:[%s2 + $0x80] sm:$0xff]
  %v411 = vld [vmem:[%s2 + $0x88] sm:$0xff]
  %v412 = vld [vmem:[%s2 + $0x90] sm:$0xff]
  %v413 = vld [vmem:[%s2 + $0x98] sm:$0xff]
  %v414 = vld [vmem:[%s2 + $0xa0] sm:$0xff]
  %v415 = vld [vmem:[%s2 + $0xa8] sm:$0xff]
  %v416 = vld [vmem:[%s2 + $0xb0] sm:$0xff]
  %v417 = vld [vmem:[%s2 + $0xb8] sm:$0xff]
  %v418 = vld [vmem:[%s2 + $0xc0] sm:$0xff]
  %v419 = vld [vmem:[%s2 + $0xc8] sm:$0xff]
  %v420 = vld [vmem:[%s2 + $0xd0] sm:$0xff]
  %v421 = vld [vmem:[%s2 + $0xd8] sm:$0xff]
  %v422 = vld [vmem:[%s2 + $0xe0] sm:$0xff]
  %v423 = vld [vmem:[%s2 + $0xe8] sm:$0xff]
  %v424 = vld [vmem:[%s2 + $0xf0] sm:$0xff]
  %v425 = vld [vmem:[%s2 + $0xf8] sm:$0xff]
  %v426 = vld [vmem:[%s2 + $0x100] sm:$0xff]
  %v427 = vld [vmem:[%s2 + $0x108] sm:$0xff]
  %v428 = vld [vmem:[%s2 + $0x110] sm:$0xff]
  %v429 = vld [vmem:[%s2 + $0x118] sm:$0xff]
  %v430 = vld [vmem:[%s2 + $0x120] sm:$0xff]
  %v431 = vld [vmem:[%s2 + $0x128] sm:$0xff]
  %v432 = vld [vmem:[%s2 + $0x130] sm:$0xff]
  %v433 = vld [vmem:[%s2 + $0x138] sm:$0xff]
  %v434 = vld [vmem:[%s2 + $0x140] sm:$0xff]
  %v435 = vld [vmem:[%s2 + $0x148] sm:$0xff]
  %v436 = vld [vmem:[%s2 + $0x150] sm:$0xff]
  %v437 = vld [vmem:[%s2 + $0x158] sm:$0xff]
  %v438 = vld [vmem:[%s2 + $0x160] sm:$0xff]
  %v439 = vld [vmem:[%s2 + $0x168] sm:$0xff]
  %v440 = vld [vmem:[%s2 + $0x170] sm:$0xff]
  %v441 = vld [vmem:[%s2 + $0x178] sm:$0xff]
  %v442 = vadd.f32 %v319, %v393
  %v443 = vxor.u32 %v442, 2147483648
  %v444 = vmul.f32 %v443, 1.442695
  %v445 = vpow.pop %v444
  %v446 = vadd.f32 %v445, 1.0
  %v447 = vrcp.pop %v446
  %v448 = vmul.f32 1.0, %v447
  %v450 = vlaneseq
  %v451 = vshrl.u32 %v450, 7
  %v452 = vsub.s32 1, %v451
  %v453 = vrot.slane %v393, %v452
  %v455 = vadd.f32 %v321, %v453
  %v456 = vxor.u32 %v455, 2147483648
  %v457 = vmul.f32 %v456, 1.442695
  %v458 = vpow.pop %v457
  %v459 = vadd.f32 %v458, 1.0
  %v460 = vrcp.pop %v459
  %v461 = vmul.f32 1.0, %v460
  %v462 = vlaneseq
  %v463 = vshrl.u32 %v462, 7
  %v464 = vsub.s32 2, %v463
  %v465 = vrot.slane %v393, %v464
  %v467 = vmul.f32 %v448, %v465
  %v468 = vadd.f32 %v390, %v467
  %v469 = vtanh.pop %v468
  %v470 = vsub.f32 1.0, %v461
  %v471 = vmul.f32 %v470, %v469
  %v472 = vmul.f32 %v461, 0.0
  %v473 = vadd.f32 %v471, %v472
  %474 = vst [vmem:[#allocation2] sm:$0x1] %v473
  %v475 = vlaneseq
  %v476 = vshrl.u32 %v475, 7
  %v477 = vsub.s32 0, %v476
  %v478 = vrot.slane %v393, %v477
  %480 = vmatprep.subr.mxu0 %v395
  %481 = vmatpush1.msra.mxu0 %v394
  %482 = vmatprep.subr.mxu0 %v398
  %483 = vmatpush1.msra.mxu0 %v397
  %484 = vmatprep.subr.mxu0 %v401
  %485 = vmatpush1.msra.mxu0 %v400
  %486 = vmatprep.subr.mxu0 %v404
  %487 = vmatpush1.msra.mxu0 %v403
  %488 = vmatprep.subr.mxu0 %v407
  %489 = vmatpush1.msra.mxu0 %v406
  %490 = vmatprep.subr.mxu0 %v410
  %491 = vmatpush1.msra.mxu0 %v409
  %492 = vmatprep.subr.mxu0 %v413
  %493 = vmatpush1.msra.mxu0 %v412
  %494 = vmatprep.subr.mxu0 %v416
  %495 = vmatpush1.msra.mxu0 %v415
  %496 = vmatprep.subr.mxu0 %v419
  %497 = vmatpush1.msra.mxu0 %v418
  %498 = vmatprep.subr.mxu0 %v422
  %499 = vmatpush1.msra.mxu0 %v421
  %500 = vmatprep.subr.mxu0 %v425
  %501 = vmatpush1.msra.mxu0 %v424
  %502 = vmatprep.subr.mxu0 %v428
  %503 = vmatpush1.msra.mxu0 %v427
  %504 = vmatprep.subr.mxu0 %v431
  %505 = vmatpush1.msra.mxu0 %v430
  %506 = vmatprep.subr.mxu0 %v434
  %507 = vmatpush1.msra.mxu0 %v433
  %508 = vmatprep.subr.mxu0 %v437
  %509 = vmatpush1.msra.mxu0 %v436
  %510 = vmatprep.subr.mxu0 %v440
  %511 = vmatpush1.msra.mxu0 %v439
  %512 = vmatprep.subr.mxu0 0.0
  %513 = vmatpush1.msra.mxu0 0.0
  %514 = vmatprep.subr.mxu0 0.0
  %515 = vmatpush1.msra.mxu0 0.0
  %516 = vmatprep.subr.mxu0 0.0
  %517 = vmatpush1.msra.mxu0 0.0
  %518 = vmatprep.subr.mxu0 0.0
  %519 = vmatpush1.msra.mxu0 0.0
  %520 = vmatprep.subr.mxu0 0.0
  %521 = vmatpush1.msra.mxu0 0.0
  %522 = vmatprep.subr.mxu0 0.0
  %523 = vmatpush1.msra.mxu0 0.0
  %524 = vmatprep.subr.mxu0 0.0
  %525 = vmatpush1.msra.mxu0 0.0
  %526 = vmatprep.subr.mxu0 0.0
  %527 = vmatpush1.msra.mxu0 0.0
  %528 = vmatprep.subr.mxu0 0.0
  %529 = vmatpush1.msra.mxu0 0.0
  %530 = vmatprep.subr.mxu0 0.0
  %531 = vmatpush1.msra.mxu0 0.0
  %532 = vmatprep.subr.mxu0 0.0
  %533 = vmatpush1.msra.mxu0 0.0
  %534 = vmatprep.subr.mxu0 0.0
  %535 = vmatpush1.msra.mxu0 0.0
  %536 = vmatprep.subr.mxu0 0.0
  %537 = vmatpush1.msra.mxu0 0.0
  %538 = vmatprep.subr.mxu0 0.0
  %539 = vmatpush1.msra.mxu0 0.0
  %540 = vmatprep.subr.mxu0 0.0
  %541 = vmatpush1.msra.mxu0 0.0
  %542 = vmatprep.subr.mxu0 0.0
  %543 = vmatpush1.msra.mxu0 0.0
  %544 = vmatprep.mubr.f32.mxu0 0.0
  %545 = vmatmul.mubr.f32.gmra.mrb[0].mxu0 %v473
  %v546 = vpop.f32.mrb[0].mxu0
  %v547 = vadd.f32 %v478, %v546
  %v548 = vpop.f32.mrb[0].mxu0
  %v549 = vadd.f32 %v453, %v548
  %550 = vdwg.mxu0
  %551 = vmatprep.subr.mxu0 0.0
  %552 = vmatpush1.msra.mxu0 %v396
  %553 = vmatprep.subr.mxu0 0.0
  %554 = vmatpush1.msra.mxu0 %v399
  %555 = vmatprep.subr.mxu0 0.0
  %556 = vmatpush1.msra.mxu0 %v402
  %557 = vmatprep.subr.mxu0 0.0
  %558 = vmatpush1.msra.mxu0 %v405
  %559 = vmatprep.subr.mxu0 0.0
  %560 = vmatpush1.msra.mxu0 %v408
  %561 = vmatprep.subr.mxu0 0.0
  %562 = vmatpush1.msra.mxu0 %v411
  %563 = vmatprep.subr.mxu0 0.0
  %564 = vmatpush1.msra.mxu0 %v414
  %565 = vmatprep.subr.mxu0 0.0
  %566 = vmatpush1.msra.mxu0 %v417
  %567 = vmatprep.subr.mxu0 0.0
  %568 = vmatpush1.msra.mxu0 %v420
  %569 = vmatprep.subr.mxu0 0.0
  %570 = vmatpush1.msra.mxu0 %v423
  %571 = vmatprep.subr.mxu0 0.0
  %572 = vmatpush1.msra.mxu0 %v426
  %573 = vmatprep.subr.mxu0 0.0
  %574 = vmatpush1.msra.mxu0 %v429
  %575 = vmatprep.subr.mxu0 0.0
  %576 = vmatpush1.msra.mxu0 %v432
  %577 = vmatprep.subr.mxu0 0.0
  %578 = vmatpush1.msra.mxu0 %v435
  %579 = vmatprep.subr.mxu0 0.0
  %580 = vmatpush1.msra.mxu0 %v438
  %581 = vmatprep.subr.mxu0 0.0
  %582 = vmatpush1.msra.mxu0 %v441
  %583 = vmatprep.subr.mxu0 0.0
  %584 = vmatpush1.msra.mxu0 0.0
  %585 = vmatprep.subr.mxu0 0.0
  %586 = vmatpush1.msra.mxu0 0.0
  %587 = vmatprep.subr.mxu0 0.0
  %588 = vmatpush1.msra.mxu0 0.0
  %589 = vmatprep.subr.mxu0 0.0
  %590 = vmatpush1.msra.mxu0 0.0
  %591 = vmatprep.subr.mxu0 0.0
  %592 = vmatpush1.msra.mxu0 0.0
  %593 = vmatprep.subr.mxu0 0.0
  %594 = vmatpush1.msra.mxu0 0.0
  %595 = vmatprep.subr.mxu0 0.0
  %596 = vmatpush1.msra.mxu0 0.0
  %597 = vmatprep.subr.mxu0 0.0
  %598 = vmatpush1.msra.mxu0 0.0
  %599 = vmatprep.subr.mxu0 0.0
  %600 = vmatpush1.msra.mxu0 0.0
  %601 = vmatprep.subr.mxu0 0.0
  %602 = vmatpush1.msra.mxu0 0.0
  %603 = vmatprep.subr.mxu0 0.0
  %604 = vmatpush1.msra.mxu0 0.0
  %605 = vmatprep.subr.mxu0 0.0
  %606 = vmatpush1.msra.mxu0 0.0
  %607 = vmatprep.subr.mxu0 0.0
  %608 = vmatpush1.msra.mxu0 0.0
  %609 = vmatprep.subr.mxu0 0.0
  %610 = vmatpush1.msra.mxu0 0.0
  %611 = vmatprep.subr.mxu0 0.0
  %612 = vmatpush1.msra.mxu0 0.0
  %613 = vmatprep.subr.mxu0 0.0
  %614 = vmatpush1.msra.mxu0 0.0
  %615 = vmatprep.mubr.f32.mxu0 0.0
  %616 = vmatmul.mubr.f32.gmra.mrb[0].mxu0 %v473
  %v617 = vpop.f32.mrb[0].mxu0
  %v618 = vadd.f32 %v465, %v617
  %v619 = vpop.f32.mrb[0].mxu0
  %620 = vdwg.mxu0
  %v622 = vrot.slane %v547, 7
  %v624 = vadd.f32 %v319, %v622
  %v625 = vxor.u32 %v624, 2147483648
  %v626 = vmul.f32 %v625, 1.442695
  %v627 = vpow.pop %v626
  %v628 = vadd.f32 %v627, 1.0
  %v629 = vrcp.pop %v628
  %v630 = vmul.f32 1.0, %v629
  %v632 = vrot.slane %v549, 7
  %v634 = vadd.f32 %v321, %v632
  %v635 = vxor.u32 %v634, 2147483648
  %v636 = vmul.f32 %v635, 1.442695
  %v637 = vpow.pop %v636
  %v638 = vadd.f32 %v637, 1.0
  %v639 = vrcp.pop %v638
  %v640 = vmul.f32 1.0, %v639
  %v642 = vrot.slane %v618, 7
  %v644 = vmul.f32 %v630, %v642
  %v645 = vadd.f32 %v390, %v644
  %v646 = vtanh.pop %v645
  %v647 = vsub.f32 1.0, %v640
  %v648 = vmul.f32 %v647, %v646
  %v650 = vrot.slane %v473, 7
  %v652 = vmul.f32 %v640, %v650
  %v653 = vadd.f32 %v648, %v652
  %654 = vst [vmem:[#allocation2] sm:$0x2] %v653
  %v655 = vld [vmem:[#allocation2] sm:$0x3]
  %v656 = vld [vmem:[%s3] sm:$0xff]
  %v657 = vld [vmem:[%s3 + $0x8] sm:$0xff]
  %v658 = vld [vmem:[%s3 + $0x10] sm:$0xff]
  %v659 = vld [vmem:[%s3 + $0x18] sm:$0xff]
  %v660 = vld [vmem:[%s3 + $0x20] sm:$0xff]
  %v661 = vld [vmem:[%s3 + $0x28] sm:$0xff]
  %v662 = vld [vmem:[%s3 + $0x30] sm:$0xff]
  %v663 = vld [vmem:[%s3 + $0x38] sm:$0xff]
  %v664 = vld [vmem:[%s3 + $0x40] sm:$0xff]
  %v665 = vld [vmem:[%s3 + $0x48] sm:$0xff]
  %v666 = vld [vmem:[%s3 + $0x50] sm:$0xff]
  %v667 = vld [vmem:[%s3 + $0x58] sm:$0xff]
  %v668 = vld [vmem:[%s3 + $0x60] sm:$0xff]
  %v669 = vld [vmem:[%s3 + $0x68] sm:$0xff]
  %v670 = vld [vmem:[%s3 + $0x70] sm:$0xff]
  %v671 = vld [vmem:[%s3 + $0x78] sm:$0xff]
  %v672 = vld [vmem:[%s6 + $0x8] sm:$0x1]
  %v674 = vlaneseq
  %v675 = vshrl.u32 %v674, 7
  %v676 = vsub.s32 0, %v675
  %v677 = vrot.slane %v672, %v676
  %679 = vmatprep.subr.mxu0 0.0
  %680 = vmatpush1.msra.mxu0 %v656
  %681 = vmatprep.subr.mxu0 0.0
  %682 = vmatpush1.msra.mxu0 %v657
  %683 = vmatprep.subr.mxu0 0.0
  %684 = vmatpush1.msra.mxu0 %v658
  %685 = vmatprep.subr.mxu0 0.0
  %686 = vmatpush1.msra.mxu0 %v659
  %687 = vmatprep.subr.mxu0 0.0
  %688 = vmatpush1.msra.mxu0 %v660
  %689 = vmatprep.subr.mxu0 0.0
  %690 = vmatpush1.msra.mxu0 %v661
  %691 = vmatprep.subr.mxu0 0.0
  %692 = vmatpush1.msra.mxu0 %v662
  %693 = vmatprep.subr.mxu0 0.0
  %694 = vmatpush1.msra.mxu0 %v663
  %695 = vmatprep.subr.mxu0 0.0
  %696 = vmatpush1.msra.mxu0 %v664
  %697 = vmatprep.subr.mxu0 0.0
  %698 = vmatpush1.msra.mxu0 %v665
  %699 = vmatprep.subr.mxu0 0.0
  %700 = vmatpush1.msra.mxu0 %v666
  %701 = vmatprep.subr.mxu0 0.0
  %702 = vmatpush1.msra.mxu0 %v667
  %703 = vmatprep.subr.mxu0 0.0
  %704 = vmatpush1.msra.mxu0 %v668
  %705 = vmatprep.subr.mxu0 0.0
  %706 = vmatpush1.msra.mxu0 %v669
  %707 = vmatprep.subr.mxu0 0.0
  %708 = vmatpush1.msra.mxu0 %v670
  %709 = vmatprep.subr.mxu0 0.0
  %710 = vmatpush1.msra.mxu0 %v671
  %711 = vmatprep.subr.mxu0 0.0
  %712 = vmatpush1.msra.mxu0 0.0
  %713 = vmatprep.subr.mxu0 0.0
  %714 = vmatpush1.msra.mxu0 0.0
  %715 = vmatprep.subr.mxu0 0.0
  %716 = vmatpush1.msra.mxu0 0.0
  %717 = vmatprep.subr.mxu0 0.0
  %718 = vmatpush1.msra.mxu0 0.0
  %719 = vmatprep.subr.mxu0 0.0
  %720 = vmatpush1.msra.mxu0 0.0
  %721 = vmatprep.subr.mxu0 0.0
  %722 = vmatpush1.msra.mxu0 0.0
  %723 = vmatprep.subr.mxu0 0.0
  %724 = vmatpush1.msra.mxu0 0.0
  %725 = vmatprep.subr.mxu0 0.0
  %726 = vmatpush1.msra.mxu0 0.0
  %727 = vmatprep.subr.mxu0 0.0
  %728 = vmatpush1.msra.mxu0 0.0
  %729 = vmatprep.subr.mxu0 0.0
  %730 = vmatpush1.msra.mxu0 0.0
  %731 = vmatprep.subr.mxu0 0.0
  %732 = vmatpush1.msra.mxu0 0.0
  %733 = vmatprep.subr.mxu0 0.0
  %734 = vmatpush1.msra.mxu0 0.0
  %735 = vmatprep.subr.mxu0 0.0
  %736 = vmatpush1.msra.mxu0 0.0
  %737 = vmatprep.subr.mxu0 0.0
  %738 = vmatpush1.msra.mxu0 0.0
  %739 = vmatprep.subr.mxu0 0.0
  %740 = vmatpush1.msra.mxu0 0.0
  %741 = vmatprep.subr.mxu0 0.0
  %742 = vmatpush1.msra.mxu0 0.0
  %743 = vmatprep.mubr.f32.mxu0 0.0
  %744 = vmatmul.mubr.f32.gmra.mrb[0].mxu0 %v655
  %v745 = vpop.f32.mrb[0].mxu0
  %v746 = vadd.f32 %v677, %v745
  %v747 = vpop.f32.mrb[0].mxu0
  %748 = vdwg.mxu0
  %v749 = vmax.f32 %v746, 0.0
  %v750 = vld [vmem:[%s4] sm:$0xff]
  %v751 = vld [vmem:[%s4 + $0x8] sm:$0xff]
  %v752 = vld [vmem:[%s4 + $0x10] sm:$0xff]
  %v753 = vld [vmem:[%s4 + $0x18] sm:$0xff]
  %v754 = vld [vmem:[%s4 + $0x20] sm:$0xff]
  %v755 = vld [vmem:[%s4 + $0x28] sm:$0xff]
  %v756 = vld [vmem:[%s4 + $0x30] sm:$0xff]
  %v757 = vld [vmem:[%s4 + $0x38] sm:$0xff]
  %v758 = vld [vmem:[%s4 + $0x40] sm:$0xff]
  %v759 = vld [vmem:[%s4 + $0x48] sm:$0xff]
  %v760 = vld [vmem:[%s4 + $0x50] sm:$0xff]
  %v761 = vld [vmem:[%s4 + $0x58] sm:$0xff]
  %v762 = vld [vmem:[%s4 + $0x60] sm:$0xff]
  %v763 = vld [vmem:[%s4 + $0x68] sm:$0xff]
  %v764 = vld [vmem:[%s4 + $0x70] sm:$0xff]
  %v765 = vld [vmem:[%s4 + $0x78] sm:$0xff]
  %v766 = vld [vmem:[%s4 + $0x80] sm:$0xff]
  %v767 = vld [vmem:[%s4 + $0x88] sm:$0xff]
  %v768 = vld [vmem:[%s4 + $0x90] sm:$0xff]
  %v769 = vld [vmem:[%s4 + $0x98] sm:$0xff]
  %v770 = vld [vmem:[%s4 + $0xa0] sm:$0xff]
  %v771 = vld [vmem:[%s4 + $0xa8] sm:$0xff]
  %v772 = vld [vmem:[%s4 + $0xb0] sm:$0xff]
  %v773 = vld [vmem:[%s4 + $0xb8] sm:$0xff]
  %v774 = vld [vmem:[%s4 + $0xc0] sm:$0xff]
  %v775 = vld [vmem:[%s4 + $0xc8] sm:$0xff]
  %v776 = vld [vmem:[%s4 + $0xd0] sm:$0xff]
  %v777 = vld [vmem:[%s4 + $0xd8] sm:$0xff]
  %v778 = vld [vmem:[%s4 + $0xe0] sm:$0xff]
  %v779 = vld [vmem:[%s4 + $0xe8] sm:$0xff]
  %v780 = vld [vmem:[%s4 + $0xf0] sm:$0xff]
  %v781 = vld [vmem:[%s4 + $0xf8] sm:$0xff]
  %v782 = vld [vmem:[%s6 + $0x9] sm:$0x1]
  %v784 = vlaneseq
  %v785 = vshrl.u32 %v784, 7
  %v786 = vsub.s32 0, %v785
  %v787 = vrot.slane %v782, %v786
  %789 = vmatprep.subr.mxu0 0.0
  %790 = vmatpush1.msra.mxu0 %v750
  %791 = vmatprep.subr.mxu0 0.0
  %792 = vmatpush1.msra.mxu0 %v751
  %793 = vmatprep.subr.mxu0 0.0
  %794 = vmatpush1.msra.mxu0 %v752
  %795 = vmatprep.subr.mxu0 0.0
  %796 = vmatpush1.msra.mxu0 %v753
  %797 = vmatprep.subr.mxu0 0.0
  %798 = vmatpush1.msra.mxu0 %v754
  %799 = vmatprep.subr.mxu0 0.0
  %800 = vmatpush1.msra.mxu0 %v755
  %801 = vmatprep.subr.mxu0 0.0
  %802 = vmatpush1.msra.mxu0 %v756
  %803 = vmatprep.subr.mxu0 0.0
  %804 = vmatpush1.msra.mxu0 %v757
  %805 = vmatprep.subr.mxu0 0.0
  %806 = vmatpush1.msra.mxu0 %v758
  %807 = vmatprep.subr.mxu0 0.0
  %808 = vmatpush1.msra.mxu0 %v759
  %809 = vmatprep.subr.mxu0 0.0
  %810 = vmatpush1.msra.mxu0 %v760
  %811 = vmatprep.subr.mxu0 0.0
  %812 = vmatpush1.msra.mxu0 %v761
  %813 = vmatprep.subr.mxu0 0.0
  %814 = vmatpush1.msra.mxu0 %v762
  %815 = vmatprep.subr.mxu0 0.0
  %816 = vmatpush1.msra.mxu0 %v763
  %817 = vmatprep.subr.mxu0 0.0
  %818 = vmatpush1.msra.mxu0 %v764
  %819 = vmatprep.subr.mxu0 0.0
  %820 = vmatpush1.msra.mxu0 %v765
  %821 = vmatprep.subr.mxu0 0.0
  %822 = vmatpush1.msra.mxu0 %v766
  %823 = vmatprep.subr.mxu0 0.0
  %824 = vmatpush1.msra.mxu0 %v767
  %825 = vmatprep.subr.mxu0 0.0
  %826 = vmatpush1.msra.mxu0 %v768
  %827 = vmatprep.subr.mxu0 0.0
  %828 = vmatpush1.msra.mxu0 %v769
  %829 = vmatprep.subr.mxu0 0.0
  %830 = vmatpush1.msra.mxu0 %v770
  %831 = vmatprep.subr.mxu0 0.0
  %832 = vmatpush1.msra.mxu0 %v771
  %833 = vmatprep.subr.mxu0 0.0
  %834 = vmatpush1.msra.mxu0 %v772
  %835 = vmatprep.subr.mxu0 0.0
  %836 = vmatpush1.msra.mxu0 %v773
  %837 = vmatprep.subr.mxu0 0.0
  %838 = vmatpush1.msra.mxu0 %v774
  %839 = vmatprep.subr.mxu0 0.0
  %840 = vmatpush1.msra.mxu0 %v775
  %841 = vmatprep.subr.mxu0 0.0
  %842 = vmatpush1.msra.mxu0 %v776
  %843 = vmatprep.subr.mxu0 0.0
  %844 = vmatpush1.msra.mxu0 %v777
  %845 = vmatprep.subr.mxu0 0.0
  %846 = vmatpush1.msra.mxu0 %v778
  %847 = vmatprep.subr.mxu0 0.0
  %848 = vmatpush1.msra.mxu0 %v779
  %849 = vmatprep.subr.mxu0 0.0
  %850 = vmatpush1.msra.mxu0 %v780
  %851 = vmatprep.subr.mxu0 0.0
  %852 = vmatpush1.msra.mxu0 %v781
  %853 = vmatprep.mubr.f32.mxu0 %v655
  %854 = vmatmul.mubr.f32.gmra.mrb[0].mxu0 %v749
  %v855 = vpop.f32.mrb[0].mxu0
  %v856 = vadd.f32 %v787, %v855
  %v857 = vpop.f32.mrb[0].mxu0
  %858 = vdwg.mxu0
  %v859 = vld [vmem:[%s5 + $0x58] sm:$0xff]
  %v860 = vld [vmem:[%s5 + $0x60] sm:$0xff]
  %v861 = vld [vmem:[%s5 + $0x68] sm:$0xff]
  %v862 = vld [vmem:[%s5 + $0x70] sm:$0xff]
  %v863 = vld [vmem:[%s5 + $0x78] sm:$0xff]
  %v864 = vld [vmem:[%s5 + $0x80] sm:$0xff]
  %v865 = vld [vmem:[%s5 + $0x88] sm:$0xff]
  %v866 = vld [vmem:[%s5 + $0x90] sm:$0xff]
  %v867 = vld [vmem:[%s6 + $0xa] sm:$0x1]
  %v869 = vlaneseq
  %v870 = vshrl.u32 %v869, 7
  %v871 = vsub.s32 0, %v870
  %v872 = vrot.slane %v867, %v871
  %vm874 = vcmask 523264
  %v876 = vsel %vm874, %v856, 0
  %878 = vmatprep.subr.mxu0 0.0
  %879 = vmatpush1.msra.mxu0 %v859
  %880 = vmatprep.subr.mxu0 0.0
  %881 = vmatpush1.msra.mxu0 %v860
  %882 = vmatprep.subr.mxu0 0.0
  %883 = vmatpush1.msra.mxu0 %v861
  %884 = vmatprep.subr.mxu0 0.0
  %885 = vmatpush1.msra.mxu0 %v862
  %886 = vmatprep.subr.mxu0 0.0
  %887 = vmatpush1.msra.mxu0 %v863
  %888 = vmatprep.subr.mxu0 0.0
  %889 = vmatpush1.msra.mxu0 %v864
  %890 = vmatprep.subr.mxu0 0.0
  %891 = vmatpush1.msra.mxu0 %v865
  %892 = vmatprep.subr.mxu0 0.0
  %893 = vmatpush1.msra.mxu0 %v866
  %894 = vmatprep.subr.mxu0 0.0
  %895 = vmatpush1.msra.mxu0 0.0
  %896 = vmatprep.subr.mxu0 0.0
  %897 = vmatpush1.msra.mxu0 0.0
  %898 = vmatprep.subr.mxu0 0.0
  %899 = vmatpush1.msra.mxu0 0.0
  %900 = vmatprep.subr.mxu0 0.0
  %901 = vmatpush1.msra.mxu0 0.0
  %902 = vmatprep.subr.mxu0 0.0
  %903 = vmatpush1.msra.mxu0 0.0
  %904 = vmatprep.subr.mxu0 0.0
  %905 = vmatpush1.msra.mxu0 0.0
  %906 = vmatprep.subr.mxu0 0.0
  %907 = vmatpush1.msra.mxu0 0.0
  %908 = vmatprep.subr.mxu0 0.0
  %909 = vmatpush1.msra.mxu0 0.0
  %910 = vmatprep.subr.mxu0 0.0
  %911 = vmatpush1.msra.mxu0 0.0
  %912 = vmatprep.subr.mxu0 0.0
  %913 = vmatpush1.msra.mxu0 0.0
  %914 = vmatprep.subr.mxu0 0.0
  %915 = vmatpush1.msra.mxu0 0.0
  %916 = vmatprep.subr.mxu0 0.0
  %917 = vmatpush1.msra.mxu0 0.0
  %918 = vmatprep.subr.mxu0 0.0
  %919 = vmatpush1.msra.mxu0 0.0
  %920 = vmatprep.subr.mxu0 0.0
  %921 = vmatpush1.msra.mxu0 0.0
  %922 = vmatprep.subr.mxu0 0.0
  %923 = vmatpush1.msra.mxu0 0.0
  %924 = vmatprep.subr.mxu0 0.0
  %925 = vmatpush1.msra.mxu0 0.0
  %926 = vmatprep.subr.mxu0 0.0
  %927 = vmatpush1.msra.mxu0 0.0
  %928 = vmatprep.subr.mxu0 0.0
  %929 = vmatpush1.msra.mxu0 0.0
  %930 = vmatprep.subr.mxu0 0.0
  %931 = vmatpush1.msra.mxu0 0.0
  %932 = vmatprep.subr.mxu0 0.0
  %933 = vmatpush1.msra.mxu0 0.0
  %934 = vmatprep.subr.mxu0 0.0
  %935 = vmatpush1.msra.mxu0 0.0
  %936 = vmatprep.subr.mxu0 0.0
  %937 = vmatpush1.msra.mxu0 0.0
  %938 = vmatprep.subr.mxu0 0.0
  %939 = vmatpush1.msra.mxu0 0.0
  %940 = vmatprep.subr.mxu0 0.0
  %941 = vmatpush1.msra.mxu0 0.0
  %942 = vmatprep.mubr.f32.mxu0 0.0
  %943 = vmatmul.mubr.f32.gmra.mrb[0].mxu0 %v876
  %v944 = vpop.f32.mrb[0].mxu0
  %v945 = vadd.f32 %v872, %v944
  %v946 = vpop.f32.mrb[0].mxu0
  %947 = vdwg.mxu0
  %v948 = vmax.f32 %v945, 0.0
  %v949 = vld [vmem:[%s5 + $0x98] sm:$0xff]
  %v950 = vld [vmem:[%s5 + $0xa0] sm:$0xff]
  %v951 = vld [vmem:[%s5 + $0xa8] sm:$0xff]
  %v952 = vld [vmem:[%s5 + $0xb0] sm:$0xff]
  %v953 = vld [vmem:[%s5 + $0xb8] sm:$0xff]
  %v954 = vld [vmem:[%s5 + $0xc0] sm:$0xff]
  %v955 = vld [vmem:[%s5 + $0xc8] sm:$0xff]
  %v956 = vld [vmem:[%s5 + $0xd0] sm:$0xff]
  %v957 = vld [vmem:[%s5 + $0xd8] sm:$0xff]
  %v958 = vld [vmem:[%s5 + $0xe0] sm:$0xff]
  %v959 = vld [vmem:[%s5 + $0xe8] sm:$0xff]
  %v960 = vld [vmem:[%s5 + $0xf0] sm:$0xff]
  %v961 = vld [vmem:[%s5 + $0xf8] sm:$0xff]
  %v962 = vld [vmem:[%s5 + $0x100] sm:$0xff]
  %v963 = vld [vmem:[%s5 + $0x108] sm:$0xff]
  %v964 = vld [vmem:[%s5 + $0x110] sm:$0xff]
  %v965 = vld [vmem:[%s5 + $0x118] sm:$0xff]
  %v966 = vld [vmem:[%s5 + $0x120] sm:$0xff]
  %v967 = vld [vmem:[%s5 + $0x128] sm:$0xff]
  %v968 = vld [vmem:[%s5 + $0x130] sm:$0xff]
  %v969 = vld [vmem:[%s5 + $0x138] sm:$0xff]
  %v970 = vld [vmem:[%s5 + $0x140] sm:$0xff]
  %v971 = vld [vmem:[%s5 + $0x148] sm:$0xff]
  %v972 = vld [vmem:[%s5 + $0x150] sm:$0xff]
  %v973 = vld [vmem:[%s5 + $0x158] sm:$0xff]
  %v974 = vld [vmem:[%s5 + $0x160] sm:$0xff]
  %v975 = vld [vmem:[%s5 + $0x168] sm:$0xff]
  %v976 = vld [vmem:[%s5 + $0x170] sm:$0xff]
  %977 = vrot.lane.b32.xlu0 %v26, 64
  %v978 = vpop.permute.xlu0 %977
  %v980 = vsel %vm874, %v856, %v978
  %v981 = vld [vmem:[%s6 + $0xb] sm:$0x1]
  %v983 = vlaneseq
  %v984 = vshrl.u32 %v983, 7
  %v985 = vsub.s32 0, %v984
  %v986 = vrot.slane %v981, %v985
  %vm988 = vcmask 785408
  %v990 = vsel %vm988, %v980, 0
  %992 = vmatprep.subr.mxu0 0.0
  %993 = vmatpush1.msra.mxu0 %v949
  %994 = vmatprep.subr.mxu0 0.0
  %995 = vmatpush1.msra.mxu0 %v950
  %996 = vmatprep.subr.mxu0 0.0
  %997 = vmatpush1.msra.mxu0 %v951
  %998 = vmatprep.subr.mxu0 0.0
  %999 = vmatpush1.msra.mxu0 %v952
  %1000 = vmatprep.subr.mxu0 0.0
  %1001 = vmatpush1.msra.mxu0 %v953
  %1002 = vmatprep.subr.mxu0 0.0
  %1003 = vmatpush1.msra.mxu0 %v954
  %1004 = vmatprep.subr.mxu0 0.0
  %1005 = vmatpush1.msra.mxu0 %v955
  %1006 = vmatprep.subr.mxu0 0.0
  %1007 = vmatpush1.msra.mxu0 %v956
  %1008 = vmatprep.subr.mxu0 0.0
  %1009 = vmatpush1.msra.mxu0 %v957
  %1010 = vmatprep.subr.mxu0 0.0
  %1011 = vmatpush1.msra.mxu0 %v958
  %1012 = vmatprep.subr.mxu0 0.0
  %1013 = vmatpush1.msra.mxu0 %v959
  %1014 = vmatprep.subr.mxu0 0.0
  %1015 = vmatpush1.msra.mxu0 %v960
  %1016 = vmatprep.subr.mxu0 0.0
  %1017 = vmatpush1.msra.mxu0 %v961
  %1018 = vmatprep.subr.mxu0 0.0
  %1019 = vmatpush1.msra.mxu0 %v962
  %1020 = vmatprep.subr.mxu0 0.0
  %1021 = vmatpush1.msra.mxu0 %v963
  %1022 = vmatprep.subr.mxu0 0.0
  %1023 = vmatpush1.msra.mxu0 %v964
  %1024 = vmatprep.subr.mxu0 0.0
  %1025 = vmatpush1.msra.mxu0 %v965
  %1026 = vmatprep.subr.mxu0 0.0
  %1027 = vmatpush1.msra.mxu0 %v966
  %1028 = vmatprep.subr.mxu0 0.0
  %1029 = vmatpush1.msra.mxu0 %v967
  %1030 = vmatprep.subr.mxu0 0.0
  %1031 = vmatpush1.msra.mxu0 %v968
  %1032 = vmatprep.subr.mxu0 0.0
  %1033 = vmatpush1.msra.mxu0 %v969
  %1034 = vmatprep.subr.mxu0 0.0
  %1035 = vmatpush1.msra.mxu0 %v970
  %1036 = vmatprep.subr.mxu0 0.0
  %1037 = vmatpush1.msra.mxu0 %v971
  %1038 = vmatprep.subr.mxu0 0.0
  %1039 = vmatpush1.msra.mxu0 %v972
  %1040 = vmatprep.subr.mxu0 0.0
  %1041 = vmatpush1.msra.mxu0 %v973
  %1042 = vmatprep.subr.mxu0 0.0
  %1043 = vmatpush1.msra.mxu0 %v974
  %1044 = vmatprep.subr.mxu0 0.0
  %1045 = vmatpush1.msra.mxu0 %v975
  %1046 = vmatprep.subr.mxu0 0.0
  %1047 = vmatpush1.msra.mxu0 %v976
  %1048 = vmatprep.subr.mxu0 0.0
  %1049 = vmatpush1.msra.mxu0 0.0
  %1050 = vmatprep.subr.mxu0 0.0
  %1051 = vmatpush1.msra.mxu0 0.0
  %1052 = vmatprep.subr.mxu0 0.0
  %1053 = vmatpush1.msra.mxu0 0.0
  %1054 = vmatprep.subr.mxu0 0.0
  %1055 = vmatpush1.msra.mxu0 0.0
  %1056 = vmatprep.mubr.f32.mxu0 %v990
  %1057 = vmatmul.mubr.f32.gmra.mrb[0].mxu0 %v948
  %v1058 = vpop.f32.mrb[0].mxu0
  %v1059 = vadd.f32 %v986, %v1058
  %v1060 = vpop.f32.mrb[0].mxu0
  %1061 = vdwg.mxu0
  %vm1062 = vcmask 123904
  %1063 = vst.msk [vmem:[%s7] sm:$0x3] %vm1062, %v1059
  // Predicated region
  $region30: #{model_forward.1} parent=0 // pred_check
    _
  $region31: #{model_forward.1} parent=0 // pred_check_branch
    %1065 = sbr.rel (0) target = $region33
  $region32: #{model_forward.1} parent=0 // pred_region
    _
  $region33: #{model_forward.1} parent=0 // pred_fallthru
    _
  // Predicated region
  $region34: #{model_forward.1} parent=0 // pred_check
    _
  $region35: #{model_forward.1} parent=0 // pred_check_branch
    %1067 = sbr.rel (0) target = $region37
  $region36: #{model_forward.1} parent=0 // pred_region
    _
  $region37: #{model_forward.1} parent=0 // pred_fallthru
    _

</llo_original>
